<compile_context>
chip_gen: v7x
topology: tpu7x:2x2x1
jax: 0.10.0
libtpu: 0.0.40
codegen_flags: <defaults>
</compile_context>

<pallas_src>
import functools
import math

import jax
import jax.numpy as jnp
from jax import lax
from jax.experimental import pallas as pl
from jax.experimental.pallas import tpu as pltpu

NUM_SEGMENTS = 16
MAX_BATCH_TILE = 256   # fills the 256-wide MXU M dim on v6e/v7x; 2 x 128-tiles on v5e


# ------------------------------ fused Pallas kernel -------------------------------

def _stable_sigmoid(y):
    # Numerically stable logistic: exp of a non-positive argument (EUP), approx
    # reciprocal also on the EUP (frees VALU slots), select/add on the VPU.
    z = jnp.exp(-jnp.abs(y))
    r = pl.reciprocal(1.0 + z, approx=True)
    return jnp.where(y >= 0.0, r, 1.0 - r)


def _fused_forward_kernel(x_ref, w_ref, b_ref, o_ref, *, num_channels, hw):
    """One batch tile (TB rows) per grid step.

    x_ref : (TB, C*HW) f32   lane-flattened input (each channel slice lane-aligned)
    w_ref : (HW, HW)   bf16  folded conv weight (grid-invariant, VMEM resident)
    b_ref : (1, HW)    f32   folded bias
    o_ref : (TB, HW)   f32   restored output rows (lane-dense store)
    """
    # L2 norm over channels: contiguous lane-aligned (TB, HW) slices, multiply-adds
    # on the VPU at full (8,128) vreg occupancy, sqrt on the EUP.
    # TODO(synk): for large C, move channels onto a reduction grid axis instead of
    # unrolling (the kernel becomes HBM-bound on reading x in that regime).
    sq = None
    for c in range(num_channels):
        xc = x_ref[:, pl.ds(c * hw, hw)]
        sq = xc * xc if sq is None else sq + xc * xc
    l2 = jnp.sqrt(sq)                                            # (TB, HW) f32

    # Segment split + Conv2d(3x3, pad=1) + chunk/cat/view restore folded into one MXU
    # GEMM: M=TB, K=N=HW, bf16 operands, f32 accumulation.
    y = jnp.dot(l2.astype(w_ref.dtype), w_ref[...],
                preferred_element_type=jnp.float32)              # (TB, HW) f32
    o_ref[...] = _stable_sigmoid(y + b_ref[...])


# ------------------------------ weight folding (weights only) ---------------------

def fold_conv_params(conv_w, conv_b, H, W, num_segments=NUM_SEGMENTS,
                     mxu_dtype=jnp.bfloat16):
    """Fold (segment split -> Conv2d(3x3, pad=1) -> chunk/cat/view restore) into a
    single linear map on the flattened L2-norm image.

    Returns:
      w_eff_t : (H*W, H*W) mxu_dtype   so that  pre_act_flat = l2_flat @ w_eff_t
      b_eff   : (1, H*W)   f32
    Pure weight preprocessing (no activation data) — hoistable across calls.
    """
    Cout, Cin, KH, KW = conv_w.shape
    ss = int(math.sqrt(num_segments))
    ws = H // ss
    HW = H * W

    co = jnp.arange(Cout).reshape(Cout, 1, 1, 1, 1, 1)
    i = jnp.arange(ws).reshape(1, ws, 1, 1, 1, 1)
    j = jnp.arange(ws).reshape(1, 1, ws, 1, 1, 1)
    ci = jnp.arange(Cin).reshape(1, 1, 1, Cin, 1, 1)
    ki = jnp.arange(KH).reshape(1, 1, 1, 1, KH, 1)
    kj = jnp.arange(KW).reshape(1, 1, 1, 1, 1, KW)

    p = i + ki - 1                              # row offset inside a segment (pad=1)
    q = j + kj - 1
    valid = (p >= 0) & (p < ws) & (q >= 0) & (q < ws)

    si = ci // ss                               # conv in-channel -> l2 spatial block
    sj = ci % ss
    h = si * ws + jnp.clip(p, 0, ws - 1)
    w = sj * ws + jnp.clip(q, 0, ws - 1)

    m = co * (ws * ws) + i * ws + j             # restored output flat index
    n = h * W + w                               # l2 flat index

    shape6 = (Cout, ws, ws, Cin, KH, KW)
    vals = jnp.where(valid, conv_w[co, ci, ki, kj], 0.0)
    n_idx = jnp.broadcast_to(n, shape6).reshape(-1)
    m_idx = jnp.broadcast_to(m, shape6).reshape(-1)
    v = jnp.broadcast_to(vals, shape6).reshape(-1).astype(jnp.float32)

    w_eff_t = jnp.zeros((HW, HW), jnp.float32).at[n_idx, m_idx].add(v)
    b_eff = jnp.repeat(conv_b.astype(jnp.float32), ws * ws).reshape(1, HW)
    return w_eff_t.astype(mxu_dtype), b_eff


# ------------------------------ batch-tile selection -------------------------------

def _pick_batch_tile(batch, max_tb=MAX_BATCH_TILE):
    """Batch rows per grid step: as large as possible (fills MXU M, big DMAs, amortized
    per-step overhead), a multiple of 8 for full (8,128) vreg occupancy / unmasked
    stores, and >= 2 grid steps when batch allows so both v7x TensorCores get work."""
    if batch > max_tb:
        if batch >= 2 * max_tb:
            return max_tb
        # Two steps; round up to a multiple of 8 (Pallas masks the padded tail rows,
        # and rows are independent in this kernel so garbage tail rows never leak).
        return min(max_tb, ((batch + 1) // 2 + 7) // 8 * 8)
    # Batch fits in one tile: split into two full (8,128)-aligned tiles when possible,
    # otherwise take the whole batch (block dim == full array dim is always legal).
    if batch >= 16 and batch % 16 == 0:
        return batch // 2
    return batch


# ------------------------------ forward pass ---------------------------------------

def local_attention_forward(x, conv_w, conv_b, num_segments=NUM_SEGMENTS,
                            mxu_dtype=jnp.bfloat16):
    """x: (B, C, H, W) float32 (NCHW).  Returns (B, 1, H, W) float32."""
    B, C, H, W = x.shape
    ss = int(math.sqrt(num_segments))
    assert ss * ss == num_segments
    assert H == W and H % ss == 0, "module assumes a square map divisible by sqrt(num_segments)"
    HW = H * W

    # Weight folding (weights only; hoistable / cacheable across calls).
    w_eff_t, b_eff = fold_conv_params(conv_w, conv_b, H, W, num_segments, mxu_dtype)

    # NCHW -> (B, C*HW): contiguous reshape (free).  Channels land contiguously on the
    # lane axis; each channel slice starts at a multiple of HW (lane-aligned).
    x_flat = x.reshape(B, C * HW)

    tb = _pick_batch_tile(B)
    grid = (pl.cdiv(B, tb),)

    kernel = functools.partial(_fused_forward_kernel, num_channels=C, hw=HW)

    out_flat = pl.pallas_call(
        kernel,
        out_shape=jax.ShapeDtypeStruct((B, HW), jnp.float32),
        grid=grid,
        in_specs=[
            pl.BlockSpec((tb, C * HW), lambda b: (b, 0)),     # batch-tiled activations
            pl.BlockSpec((HW, HW), lambda b: (0, 0)),         # resident folded weight
            pl.BlockSpec((1, HW), lambda b: (0, 0)),          # resident folded bias
        ],
        out_specs=pl.BlockSpec((tb, HW), lambda b: (b, 0)),   # lane-dense output tile
        compiler_params=pltpu.CompilerParams(
            dimension_semantics=("parallel",)),               # both TCs on v7x
    )(x_flat, w_eff_t, b_eff)

    # (B, H*W) -> (B, 1, H, W): contiguous reshape == PyTorch chunk/cat/view restore.
    return out_flat.reshape(B, 1, H, W)


# ------------------------------ pure-JAX reference (spec transcription) ------------

def _reference_forward(x, conv_w, conv_b, num_segments=NUM_SEGMENTS):
    B, C, H, W = x.shape
    ss = int(math.sqrt(num_segments))
    ws = H // ss
    l2 = jnp.sqrt(jnp.sum(x.astype(jnp.float32) ** 2, axis=1, keepdims=True))  # (B,1,H,W)
    feats = []
    for i in range(ss):
        for j in range(ss):
            feats.append(l2[:, :, i * ws:(i + 1) * ws, j * ws:(j + 1) * ws])
    local = jnp.concatenate(feats, axis=1)                                      # (B,16,ws,ws)
    conv = lax.conv_general_dilated(
        local, conv_w, window_strides=(1, 1), padding=((1, 1), (1, 1)),
        dimension_numbers=("NCHW", "OIHW", "NCHW"),
        precision=lax.Precision.HIGHEST) + conv_b.reshape(1, -1, 1, 1)
    out = jax.nn.sigmoid(conv)
    return out.reshape(B, 1, H, W)          # chunk(dim=1)->cat(dim=2)->view == reshape


# ------------------------------ deterministic params -------------------------------

def init_params(key, num_segments=NUM_SEGMENTS):
    # PyTorch Conv2d default init bounds: U(-1/sqrt(fan_in), 1/sqrt(fan_in))
    kw, kb = jax.random.split(key)
    fan_in = num_segments * 3 * 3
    bound = 1.0 / math.sqrt(fan_in)
    conv_w = jax.random.uniform(kw, (num_segments, num_segments, 3, 3),
                                jnp.float32, -bound, bound)
    conv_b = jax.random.uniform(kb, (num_segments,), jnp.float32, -bound, bound)
    return conv_w, conv_b


if __name__ == "__main__":
    key = jax.random.PRNGKey(0)
    kx, kx2, kp = jax.random.split(key, 3)

    # Small NCHW input consistent with the module (square spatial, 16 segments).
    B, C, H, W = 2, 4, 16, 16
    x = jax.random.normal(kx, (B, C, H, W), jnp.float32)
    conv_w, conv_b = init_params(kp)

    fwd = jax.jit(local_attention_forward)
    out = fwd(x, conv_w, conv_b)
    jax.block_until_ready(out)

    assert out.shape == (B, 1, H, W), out.shape
    assert out.dtype == jnp.float32

    ref = _reference_forward(x, conv_w, conv_b)
    max_err = float(jnp.max(jnp.abs(out - ref)))
    # bf16 MXU operands with f32 accumulation -> small rounding vs the f32 reference.
    assert max_err < 3e-2, max_err
    assert bool(jnp.all(jnp.isfinite(out)))
    assert bool(jnp.all((out >= 0.0) & (out <= 1.0)))     # sigmoid range (inclusive)

    # Exercise the batch-tiled path (>1 grid step, multiple-of-8 tiles) at a small size.
    B2 = 32
    x2 = jax.random.normal(kx2, (B2, C, H, W), jnp.float32)
    out2 = fwd(x2, conv_w, conv_b)
    jax.block_until_ready(out2)
    ref2 = _reference_forward(x2, conv_w, conv_b)
    assert out2.shape == (B2, 1, H, W)
    assert float(jnp.max(jnp.abs(out2 - ref2))) < 3e-2

    print("KERNEL_OK")
</pallas_src>

<mosaic_0001>
module attributes {stable_mosaic.version = 11 : i64} {
  func.func private @main(%arg0: i32) attributes {dimension_semantics = [#tpu.dimension_semantics<core_parallel>], iteration_bounds = array<i64: 2>, tpu.core_type = #tpu.core_type<sc_scalar_subcore>, window_params = []} {
    return
  }
}

module attributes {stable_mosaic.version = 11 : i64} {
  func.func private @main(%arg0: i32) attributes {dimension_semantics = [#tpu.dimension_semantics<core_parallel>], iteration_bounds = array<i64: 2>, tpu.core_type = #tpu.core_type<sc_scalar_subcore>, window_params = []} {
    return
  }
}

module attributes {stable_mosaic.version = 11 : i64} {
  func.func @_fused_forward_kernel(%arg0: i32, %arg1: memref<2x1024xf32, #tpu.memory_space<vmem>>, %arg2: memref<256x256xbf16, #tpu.memory_space<vmem>>, %arg3: memref<1x256xf32, #tpu.memory_space<vmem>>, %arg4: memref<2x256xf32, #tpu.memory_space<vmem>>) attributes {dimension_semantics = [#tpu.dimension_semantics<parallel>], iteration_bounds = array<i64: 1>, scalar_prefetch = 0 : i64, scratch_operands = 0 : i64, tpu.core_type = #tpu.core_type<tc>, window_params = [{transform_indices = @transform_0, window_bounds = array<i64: 2, 1024>}, {pipeline_mode = #tpu.pipeline_mode<synchronous>, transform_indices = @transform_1, window_bounds = array<i64: 256, 256>}, {pipeline_mode = #tpu.pipeline_mode<synchronous>, transform_indices = @transform_2, window_bounds = array<i64: 1, 256>}, {transform_indices = @transform_3, window_bounds = array<i64: 2, 256>}]} {
    %c0 = arith.constant 0 : index
    %c0_0 = arith.constant 0 : index
    %0 = vector.load %arg1[%c0, %c0_0] : memref<2x1024xf32, #tpu.memory_space<vmem>>, vector<2x256xf32>
    %1 = arith.mulf %0, %0 : vector<2x256xf32>
    %c0_1 = arith.constant 0 : index
    %c256 = arith.constant 256 : index
    %2 = vector.load %arg1[%c0_1, %c256] : memref<2x1024xf32, #tpu.memory_space<vmem>>, vector<2x256xf32>
    %3 = arith.mulf %2, %2 : vector<2x256xf32>
    %4 = arith.addf %1, %3 : vector<2x256xf32>
    %c0_2 = arith.constant 0 : index
    %c512 = arith.constant 512 : index
    %5 = vector.load %arg1[%c0_2, %c512] : memref<2x1024xf32, #tpu.memory_space<vmem>>, vector<2x256xf32>
    %6 = arith.mulf %5, %5 : vector<2x256xf32>
    %7 = arith.addf %4, %6 : vector<2x256xf32>
    %c0_3 = arith.constant 0 : index
    %c768 = arith.constant 768 : index
    %8 = vector.load %arg1[%c0_3, %c768] : memref<2x1024xf32, #tpu.memory_space<vmem>>, vector<2x256xf32>
    %9 = arith.mulf %8, %8 : vector<2x256xf32>
    %10 = arith.addf %7, %9 : vector<2x256xf32>
    %11 = math.sqrt %10 : vector<2x256xf32>
    %12 = arith.truncf %11 : vector<2x256xf32> to vector<2x256xbf16>
    %c0_4 = arith.constant 0 : index
    %c0_5 = arith.constant 0 : index
    %13 = vector.load %arg2[%c0_4, %c0_5] : memref<256x256xbf16, #tpu.memory_space<vmem>>, vector<256x256xbf16>
    %cst = arith.constant dense<0.000000e+00> : vector<2x256xf32>
    %14 = tpu.matmul %12, %13, %cst {dimension_numbers = #tpu.dot_dimension_numbers<[1], [0], [0], [1], [0, 0, 1, 1], [], []>} : vector<2x256xbf16>, vector<256x256xbf16>, vector<2x256xf32> -> vector<2x256xf32>
    %c0_6 = arith.constant 0 : index
    %c0_7 = arith.constant 0 : index
    %15 = vector.load %arg3[%c0_6, %c0_7] : memref<1x256xf32, #tpu.memory_space<vmem>>, vector<1x256xf32>
    %16 = vector.broadcast %15 : vector<1x256xf32> to vector<2x256xf32>
    %17 = arith.addf %14, %16 : vector<2x256xf32>
    %18 = math.absf %17 : vector<2x256xf32>
    %cst_8 = arith.constant 0.000000e+00 : f32
    %19 = vector.broadcast %cst_8 : f32 to vector<2x256xf32>
    %20 = arith.subf %19, %18 : vector<2x256xf32>
    %21 = math.exp %20 : vector<2x256xf32>
    %cst_9 = arith.constant 1.000000e+00 : f32
    %22 = vector.broadcast %cst_9 : f32 to vector<2x256xf32>
    %23 = arith.addf %22, %21 : vector<2x256xf32>
    %24 = tpu.reciprocal %23 {approx = true} : vector<2x256xf32> -> vector<2x256xf32>
    %cst_10 = arith.constant 0.000000e+00 : f32
    %25 = vector.broadcast %cst_10 : f32 to vector<2x256xf32>
    %26 = arith.cmpf oge, %17, %25 : vector<2x256xf32>
    %cst_11 = arith.constant 1.000000e+00 : f32
    %27 = vector.broadcast %cst_11 : f32 to vector<2x256xf32>
    %28 = arith.subf %27, %24 : vector<2x256xf32>
    %29 = arith.select %26, %24, %28 : vector<2x256xi1>, vector<2x256xf32>
    %c0_12 = arith.constant 0 : index
    %c0_13 = arith.constant 0 : index
    %30 = vector.load %arg4[%c0_12, %c0_13] : memref<2x256xf32, #tpu.memory_space<vmem>>, vector<2x256xf32>
    tpu.vector_store %arg4[%c0_12, %c0_13], %29 {strides = array<i32>} : memref<2x256xf32, #tpu.memory_space<vmem>>, vector<2x256xf32>,
    return
  }
  func.func @transform_0(%arg0: i32) -> (i32, i32) {
    %c0_i32 = arith.constant 0 : i32
    %c0_i32_0 = arith.constant 0 : i32
    return %arg0, %c0_i32 : i32, i32
  }
  func.func @transform_1(%arg0: i32) -> (i32, i32) {
    %c0_i32 = arith.constant 0 : i32
    %c0_i32_0 = arith.constant 0 : i32
    %c0_i32_1 = arith.constant 0 : i32
    return %c0_i32, %c0_i32_0 : i32, i32
  }
  func.func @transform_2(%arg0: i32) -> (i32, i32) {
    %c0_i32 = arith.constant 0 : i32
    %c0_i32_0 = arith.constant 0 : i32
    %c0_i32_1 = arith.constant 0 : i32
    return %c0_i32, %c0_i32_0 : i32, i32
  }
  func.func @transform_3(%arg0: i32) -> (i32, i32) {
    %c0_i32 = arith.constant 0 : i32
    %c0_i32_0 = arith.constant 0 : i32
    return %arg0, %c0_i32 : i32, i32
  }
}

</mosaic_0001>

<llo_original>
// kernel: local_attention_forward.1
$region0: #{local_attention_forward.1}
  #allocation0 [shape = 'u32[]', space=smem, size = 0x4, offset = 0x4, fixed_abs, tag = 'smem constant byte address 0x4 - core index']
  #allocation1 [shape = 'u32[144,128]{1,0:T(1,128)}', space=vmem, size = 0x12000, scoped, tag = 'internal scratch']
  %s0 = inlined_call_operand.vmem [shape: f32[2,1024], index: 0, kind: input, shape index: {}]
  %s1 = inlined_call_operand.vmem [shape: bf16[256,256], index: 1, kind: input, shape index: {}]
  %s2 = inlined_call_operand.vmem [shape: f32[1,256], index: 2, kind: input, shape index: {}]
  %s3 = inlined_call_operand.vmem [shape: f32[2,256], index: 3, kind: output, shape index: {}]
  %s4 = sld [smem:[#allocation0]]
  $region22: #{local_attention_forward.1} parent=0
    _
  %s6 = ssub.s32 1, %s4
  %s7 = scalar_select 0, %s6, %s4
  // Predicated region
  $region2: #{local_attention_forward.1} parent=0 // pred_check
    _
  $region3: #{local_attention_forward.1} parent=0 // pred_check_branch
    %9 = sbr.rel (0) target = $region5
  $region4: #{local_attention_forward.1} parent=0 // pred_region
    _
  $region5: #{local_attention_forward.1} parent=0 // pred_fallthru
    _
  // Predicated region
  $region6: #{local_attention_forward.1} parent=0 // pred_check
    _
  $region7: #{local_attention_forward.1} parent=0 // pred_check_branch
    %11 = sbr.rel (0) target = $region9
  $region8: #{local_attention_forward.1} parent=0 // pred_region
    _
  $region9: #{local_attention_forward.1} parent=0 // pred_fallthru
    _
  // Predicated region
  $region10: #{local_attention_forward.1} parent=0 // pred_check
    _
  $region11: #{local_attention_forward.1} parent=0 // pred_check_branch
    %13 = sbr.rel (0) target = $region13
  $region12: #{local_attention_forward.1} parent=0 // pred_region
    _
  $region13: #{local_attention_forward.1} parent=0 // pred_fallthru
    _
  %v14 = vld [vmem:[%s0] sm:$0xf]
  %v15 = vmul.f32 %v14, %v14
  %v16 = vld [vmem:[%s0 + $0x4] sm:$0xf]
  %v17 = vmul.f32 %v16, %v16
  %v18 = vadd.f32 %v15, %v17
  %v19 = vld [vmem:[%s0 + $0x8] sm:$0xf]
  %v20 = vmul.f32 %v19, %v19
  %v21 = vadd.f32 %v18, %v20
  %v22 = vld [vmem:[%s0 + $0xc] sm:$0xf]
  %v23 = vmul.f32 %v22, %v22
  %v24 = vadd.f32 %v21, %v23
  %v25 = vrsqrt.pop %v24
  %v26 = vmul.f32 %v24, %v25
  %vm27 = vcmp.eq.f32.partialorder %v24, inf
  %v28 = vsel %vm27, %v24, %v26
  %vm29 = vcmp.eq.f32.partialorder %v24, 0.0
  %v30 = vand.u32 %v24, 2147483648
  %v31 = vsel %vm29, %v30, %v28
  %v34 = vunpack.c.l.s4 1983009808
  %v35 = vunpack.c.0.s8 %v34
  %v36 = vlaneseq
  %v37 = vshrl.u32 %v36, 7
  %v38 = vsub.s32 %v35, %v37
  %v39 = vrot.slane %v31, %v38
  %v40 = vcombine.high %v39, %v39
  %v43 = vpack.c.bf16 %v39, %v39
  %v44 = vpack.c.bf16 %v40, %v40
  %v45 = vld [vmem:[%s1] sm:$0xff]
  %v46 = vld [vmem:[%s1 + $0x8] sm:$0xff]
  %v47 = vld [vmem:[%s1 + $0x10] sm:$0xff]
  %v48 = vld [vmem:[%s1 + $0x18] sm:$0xff]
  %v49 = vld [vmem:[%s1 + $0x20] sm:$0xff]
  %v50 = vld [vmem:[%s1 + $0x28] sm:$0xff]
  %v51 = vld [vmem:[%s1 + $0x30] sm:$0xff]
  %v52 = vld [vmem:[%s1 + $0x38] sm:$0xff]
  %v53 = vld [vmem:[%s1 + $0x40] sm:$0xff]
  %v54 = vld [vmem:[%s1 + $0x48] sm:$0xff]
  %v55 = vld [vmem:[%s1 + $0x50] sm:$0xff]
  %v56 = vld [vmem:[%s1 + $0x58] sm:$0xff]
  %v57 = vld [vmem:[%s1 + $0x60] sm:$0xff]
  %v58 = vld [vmem:[%s1 + $0x68] sm:$0xff]
  %v59 = vld [vmem:[%s1 + $0x70] sm:$0xff]
  %v60 = vld [vmem:[%s1 + $0x78] sm:$0xff]
  %v61 = vld [vmem:[%s1 + $0x80] sm:$0xff]
  %v62 = vld [vmem:[%s1 + $0x88] sm:$0xff]
  %v63 = vld [vmem:[%s1 + $0x90] sm:$0xff]
  %v64 = vld [vmem:[%s1 + $0x98] sm:$0xff]
  %v65 = vld [vmem:[%s1 + $0xa0] sm:$0xff]
  %v66 = vld [vmem:[%s1 + $0xa8] sm:$0xff]
  %v67 = vld [vmem:[%s1 + $0xb0] sm:$0xff]
  %v68 = vld [vmem:[%s1 + $0xb8] sm:$0xff]
  %v69 = vld [vmem:[%s1 + $0xc0] sm:$0xff]
  %v70 = vld [vmem:[%s1 + $0xc8] sm:$0xff]
  %v71 = vld [vmem:[%s1 + $0xd0] sm:$0xff]
  %v72 = vld [vmem:[%s1 + $0xd8] sm:$0xff]
  %v73 = vld [vmem:[%s1 + $0xe0] sm:$0xff]
  %v74 = vld [vmem:[%s1 + $0xe8] sm:$0xff]
  %v75 = vld [vmem:[%s1 + $0xf0] sm:$0xff]
  %v76 = vld [vmem:[%s1 + $0xf8] sm:$0xff]
  %v77 = vld [vmem:[%s2] sm:$0x3]
  %v79 = vlaneseq
  %v80 = vshrl.u32 %v79, 7
  %v81 = vsub.s32 0, %v80
  %v82 = vrot.slane %v77, %v81
  %v83 = vlaneseq
  %v84 = vshrl.u32 %v83, 7
  %v85 = vsub.s32 1, %v84
  %v86 = vrot.slane %v77, %v85
  %v121 = vunpack.c.l.b16 %v45
  %v122 = vunpack.c.h.b16 %v45
  %v123 = vunpack.c.l.b16 %v46
  %v124 = vunpack.c.h.b16 %v46
  %v125 = vunpack.c.l.b16 %v47
  %v126 = vunpack.c.h.b16 %v47
  %v127 = vunpack.c.l.b16 %v48
  %v128 = vunpack.c.h.b16 %v48
  %v129 = vunpack.c.l.b16 %v49
  %v130 = vunpack.c.h.b16 %v49
  %v131 = vunpack.c.l.b16 %v50
  %v132 = vunpack.c.h.b16 %v50
  %v133 = vunpack.c.l.b16 %v51
  %v134 = vunpack.c.h.b16 %v51
  %v135 = vunpack.c.l.b16 %v52
  %v136 = vunpack.c.h.b16 %v52
  %v137 = vunpack.c.l.b16 %v53
  %v138 = vunpack.c.h.b16 %v53
  %v139 = vunpack.c.l.b16 %v54
  %v140 = vunpack.c.h.b16 %v54
  %v141 = vunpack.c.l.b16 %v55
  %v142 = vunpack.c.h.b16 %v55
  %v143 = vunpack.c.l.b16 %v56
  %v144 = vunpack.c.h.b16 %v56
  %v145 = vunpack.c.l.b16 %v57
  %v146 = vunpack.c.h.b16 %v57
  %v147 = vunpack.c.l.b16 %v58
  %v148 = vunpack.c.h.b16 %v58
  %v149 = vunpack.c.l.b16 %v59
  %v150 = vunpack.c.h.b16 %v59
  %v151 = vunpack.c.l.b16 %v60
  %v152 = vunpack.c.h.b16 %v60
  %v153 = vunpack.c.l.b16 %v61
  %v154 = vunpack.c.h.b16 %v61
  %v155 = vunpack.c.l.b16 %v62
  %v156 = vunpack.c.h.b16 %v62
  %v157 = vunpack.c.l.b16 %v63
  %v158 = vunpack.c.h.b16 %v63
  %v159 = vunpack.c.l.b16 %v64
  %v160 = vunpack.c.h.b16 %v64
  %v161 = vunpack.c.l.b16 %v65
  %v162 = vunpack.c.h.b16 %v65
  %v163 = vunpack.c.l.b16 %v66
  %v164 = vunpack.c.h.b16 %v66
  %v165 = vunpack.c.l.b16 %v67
  %v166 = vunpack.c.h.b16 %v67
  %v167 = vunpack.c.l.b16 %v68
  %v168 = vunpack.c.h.b16 %v68
  %v169 = vunpack.c.l.b16 %v69
  %v170 = vunpack.c.h.b16 %v69
  %v171 = vunpack.c.l.b16 %v70
  %v172 = vunpack.c.h.b16 %v70
  %v173 = vunpack.c.l.b16 %v71
  %v174 = vunpack.c.h.b16 %v71
  %v175 = vunpack.c.l.b16 %v72
  %v176 = vunpack.c.h.b16 %v72
  %v177 = vunpack.c.l.b16 %v73
  %v178 = vunpack.c.h.b16 %v73
  %v179 = vunpack.c.l.b16 %v74
  %v180 = vunpack.c.h.b16 %v74
  %v181 = vunpack.c.l.b16 %v75
  %v182 = vunpack.c.h.b16 %v75
  %v183 = vunpack.c.l.b16 %v76
  %v184 = vunpack.c.h.b16 %v76
  %v185 = vpack.c.b16 %v123, %v121
  %v186 = vpack.c.b16 %v124, %v122
  %v187 = vpack.c.b16 %v127, %v125
  %v188 = vpack.c.b16 %v128, %v126
  %v189 = vpack.c.b16 %v131, %v129
  %v190 = vpack.c.b16 %v132, %v130
  %v191 = vpack.c.b16 %v135, %v133
  %v192 = vpack.c.b16 %v136, %v134
  %v193 = vpack.c.b16 %v139, %v137
  %v194 = vpack.c.b16 %v140, %v138
  %v195 = vpack.c.b16 %v143, %v141
  %v196 = vpack.c.b16 %v144, %v142
  %v197 = vpack.c.b16 %v147, %v145
  %v198 = vpack.c.b16 %v148, %v146
  %v199 = vpack.c.b16 %v151, %v149
  %v200 = vpack.c.b16 %v152, %v150
  %v201 = vpack.c.b16 %v155, %v153
  %v202 = vpack.c.b16 %v156, %v154
  %v203 = vpack.c.b16 %v159, %v157
  %v204 = vpack.c.b16 %v160, %v158
  %v205 = vpack.c.b16 %v163, %v161
  %v206 = vpack.c.b16 %v164, %v162
  %v207 = vpack.c.b16 %v167, %v165
  %v208 = vpack.c.b16 %v168, %v166
  %v209 = vpack.c.b16 %v171, %v169
  %v210 = vpack.c.b16 %v172, %v170
  %v211 = vpack.c.b16 %v175, %v173
  %v212 = vpack.c.b16 %v176, %v174
  %v213 = vpack.c.b16 %v179, %v177
  %v214 = vpack.c.b16 %v180, %v178
  %v215 = vpack.c.b16 %v183, %v181
  %v216 = vpack.c.b16 %v184, %v182
  %249 = vmatprep.subr.bf16.mxu0 %v186
  %250 = vmatpush1.bf16.msra.mxu0 %v185
  %251 = vmatprep.subr.bf16.mxu0 %v188
  %252 = vmatpush1.bf16.msra.mxu0 %v187
  %253 = vmatprep.subr.bf16.mxu0 %v190
  %254 = vmatpush1.bf16.msra.mxu0 %v189
  %255 = vmatprep.subr.bf16.mxu0 %v192
  %256 = vmatpush1.bf16.msra.mxu0 %v191
  %257 = vmatprep.subr.bf16.mxu0 %v194
  %258 = vmatpush1.bf16.msra.mxu0 %v193
  %259 = vmatprep.subr.bf16.mxu0 %v196
  %260 = vmatpush1.bf16.msra.mxu0 %v195
  %261 = vmatprep.subr.bf16.mxu0 %v198
  %262 = vmatpush1.bf16.msra.mxu0 %v197
  %263 = vmatprep.subr.bf16.mxu0 %v200
  %264 = vmatpush1.bf16.msra.mxu0 %v199
  %265 = vmatprep.subr.bf16.mxu0 %v202
  %266 = vmatpush1.bf16.msra.mxu0 %v201
  %267 = vmatprep.subr.bf16.mxu0 %v204
  %268 = vmatpush1.bf16.msra.mxu0 %v203
  %269 = vmatprep.subr.bf16.mxu0 %v206
  %270 = vmatpush1.bf16.msra.mxu0 %v205
  %271 = vmatprep.subr.bf16.mxu0 %v208
  %272 = vmatpush1.bf16.msra.mxu0 %v207
  %273 = vmatprep.subr.bf16.mxu0 %v210
  %274 = vmatpush1.bf16.msra.mxu0 %v209
  %275 = vmatprep.subr.bf16.mxu0 %v212
  %276 = vmatpush1.bf16.msra.mxu0 %v211
  %277 = vmatprep.subr.bf16.mxu0 %v214
  %278 = vmatpush1.bf16.msra.mxu0 %v213
  %279 = vmatprep.subr.bf16.mxu0 %v216
  %280 = vmatpush1.bf16.msra.mxu0 %v215
  %281 = vmatprep.mubr.bf16.mxu0 %v44
  %282 = vmatmul.mubr.bf16.gmra.mrb[0].mxu0 %v43
  %v283 = vpop.f32.mrb[0].mxu0
  %v284 = vadd.f32 %v82, %v283
  %v285 = vpop.f32.mrb[0].mxu0
  %v286 = vadd.f32 %v86, %v285
  %v287 = vpop.f32.mrb[0].mxu0
  %v288 = vpop.f32.mrb[0].mxu0
  %289 = vdwg.mxu0
  %v290 = vand.u32 2147483647, %v284
  %v291 = vand.u32 2147483647, %v286
  %v292 = vsub.f32 0.0, %v290
  %v293 = vsub.f32 0.0, %v291
  %v294 = vmul.f32 %v292, 1.442695
  %v295 = vpow.pop %v294
  %v296 = vmul.f32 %v293, 1.442695
  %v297 = vpow.pop %v296
  %v298 = vadd.f32 %v295, 1.0
  %v299 = vadd.f32 %v297, 1.0
  %v300 = vrcp.pop %v298
  %v301 = vrcp.pop %v299
  %vm302 = vcmp.ge.f32.partialorder %v284, 0.0
  %vm303 = vcmp.ge.f32.partialorder %v286, 0.0
  %v304 = vsub.f32 1.0, %v300
  %v305 = vsub.f32 1.0, %v301
  %v306 = vsel %vm302, %v300, %v304
  %v307 = vsel %vm303, %v301, %v305
  %v310 = vcombine.low %v306, %v307
  %v312 = vunpack.c.l.s4 1983009808
  %v313 = vunpack.c.0.s8 %v312
  %v314 = vlaneseq
  %v315 = vshrl.u32 %v314, 7
  %v316 = vsub.s32 %v313, %v315
  %v317 = vrot.slane %v310, %v316
  %319 = vst [vmem:[%s3] sm:$0xf] %v317
  // Predicated region
  $region14: #{local_attention_forward.1} parent=0 // pred_check
    _
  $region15: #{local_attention_forward.1} parent=0 // pred_check_branch
    %321 = sbr.rel (0) target = $region17
  $region16: #{local_attention_forward.1} parent=0 // pred_region
    _
  $region17: #{local_attention_forward.1} parent=0 // pred_fallthru
    _
  // Predicated region
  $region18: #{local_attention_forward.1} parent=0 // pred_check
    _
  $region19: #{local_attention_forward.1} parent=0 // pred_check_branch
    %323 = sbr.rel (0) target = $region21
  $region20: #{local_attention_forward.1} parent=0 // pred_region
    _
  $region21: #{local_attention_forward.1} parent=0 // pred_fallthru
    _

</llo_original>
